<compile_context>
chip_gen: v5e
topology: v5e:2x2
jax: 0.10.0
libtpu: 0.0.40
codegen_flags: <defaults>
</compile_context>

<pallas_src>
import jax
import jax.numpy as jnp
from jax.experimental import pallas as pl
from jax.experimental.pallas import tpu as pltpu


def _round_up(v, m):
    return -(-v // m) * m


def _qnet_kernel(x_ref, w1t_ref, b1_ref, w2t_ref, b2_ref, o_ref):
    # fc1 on the MXU: (tile_b, in_dim) @ (in_dim, hidden) -> (tile_b, hidden), f32 acc.
    h = jnp.dot(x_ref[...], w1t_ref[...], preferred_element_type=jnp.float32)
    h = jnp.maximum(h + b1_ref[...], 0.0)          # b1 (1, hidden) broadcasts over rows
    # fc2 stays in f32 (no extra VPU cast pass over the hidden slab; MXU slack is huge).
    out = jnp.dot(h, w2t_ref[...], preferred_element_type=jnp.float32)
    o_ref[...] = (out + b2_ref[...]).astype(o_ref.dtype)
    # Note: if this only feeds greedy action selection, fusing jnp.argmax(out, -1) here
    # and emitting an int32 (tile_b, 1) block would shrink writeback 6x (review item).


def qnet_forward(x, w1, b1, w2, b2, *, tile_b=16384, compute_dtype=None):
    """Fused QNet forward: relu(x @ W1.T + b1) @ W2.T + b2.

    x : (..., in_dim)                            streamed in its own dtype by default
    w1: (hidden, in_dim),      b1: (hidden,)     -- PyTorch nn.Linear (out, in) layout
    w2: (num_actions, hidden), b2: (num_actions,)
    returns (..., num_actions) float32.

    Call-site policy: batch many states per call; at tiny batches launch overhead
    dominates and plain XLA is preferable.
    """
    in_dim = x.shape[-1]
    hidden = w1.shape[0]
    num_actions = w2.shape[0]
    lead = x.shape[:-1]

    x2 = x.reshape(-1, in_dim)
    if compute_dtype is not None and x2.dtype != compute_dtype:
        # NOTE: this cast is an extra HBM pass over x; prefer producing x in
        # compute_dtype upstream so XLA fuses the cast for free.
        x2 = x2.astype(compute_dtype)
    B = x2.shape[0]

    # --- Batch tiling: multiple of 128 (lane-dim rule), capped at the (rounded) batch,
    # then re-balanced across the tile count so tail padding is < 128 rows per tile.
    # At the default 16384 the double-buffered x/out tiles + the f32 hidden slab are
    # ~8 MB, safe under v5e's 16 MiB scoped-VMEM default; on v6e/v7x tile_b up to
    # ~32768-65536 is also fine (raise vmem_limit_bytes beyond that).
    tile_b = max(128, _round_up(min(int(tile_b), _round_up(B, 128)), 128))
    n_tiles = -(-B // tile_b)
    tile_b = _round_up(-(-B // n_tiles), 128)
    b_pad = n_tiles * tile_b
    if b_pad != B:
        # Only the awkward-B case copies x (zeros in the tail rows; sliced off below).
        x2 = jnp.pad(x2, ((0, b_pad - B), (0, 0)))

    stream_dtype = x2.dtype
    w1t = jnp.transpose(w1).astype(stream_dtype)   # (in_dim, hidden)   -- a few KB
    w2t = jnp.transpose(w2).astype(jnp.float32)    # (hidden, actions)  -- f32 resident
    b1r = b1.reshape(1, hidden).astype(jnp.float32)
    b2r = b2.reshape(1, num_actions).astype(jnp.float32)

    cost = pl.CostEstimate(
        flops=2 * b_pad * (in_dim * hidden + hidden * num_actions),
        transcendentals=0,
        bytes_accessed=x2.size * x2.dtype.itemsize
        + w1t.size * w1t.dtype.itemsize
        + (w2t.size + b1r.size + b2r.size) * 4
        + b_pad * num_actions * 4,
    )

    out = pl.pallas_call(
        _qnet_kernel,
        out_shape=jax.ShapeDtypeStruct((b_pad, num_actions), jnp.float32),
        grid_spec=pltpu.PrefetchScalarGridSpec(
            num_scalar_prefetch=0,
            grid=(n_tiles,),
            in_specs=[
                pl.BlockSpec((tile_b, in_dim), lambda i: (i, 0)),        # streamed x
                pl.BlockSpec((in_dim, hidden), lambda i: (0, 0)),        # resident W1^T
                pl.BlockSpec((1, hidden), lambda i: (0, 0)),             # resident b1
                pl.BlockSpec((hidden, num_actions), lambda i: (0, 0)),   # resident W2^T
                pl.BlockSpec((1, num_actions), lambda i: (0, 0)),        # resident b2
            ],
            out_specs=pl.BlockSpec((tile_b, num_actions), lambda i: (i, 0)),
        ),
        compiler_params=pltpu.CompilerParams(
            dimension_semantics=("parallel",)),   # no cross-tile carry; shards TCs on v7x
        cost_estimate=cost,
    )(x2, w1t, b1r, w2t, b2r)

    if b_pad != B:
        out = out[:B]                             # drop padded tail rows
    return out.reshape(*lead, num_actions)


def init_qnet_params(key, input_dim=15, hidden_dim=64, num_actions=6):
    """PyTorch nn.Linear-style init: uniform(+/- 1/sqrt(fan_in)), (out, in) weights."""
    k1, k2, k3, k4 = jax.random.split(key, 4)
    bound1 = float(input_dim) ** -0.5
    bound2 = float(hidden_dim) ** -0.5
    w1 = jax.random.uniform(k1, (hidden_dim, input_dim), jnp.float32, -bound1, bound1)
    b1 = jax.random.uniform(k2, (hidden_dim,), jnp.float32, -bound1, bound1)
    w2 = jax.random.uniform(k3, (num_actions, hidden_dim), jnp.float32, -bound2, bound2)
    b2 = jax.random.uniform(k4, (num_actions,), jnp.float32, -bound2, bound2)
    return w1, b1, w2, b2


if __name__ == "__main__":
    key = jax.random.PRNGKey(0)
    kx, kp = jax.random.split(key)

    batch, input_dim, hidden_dim, num_actions = 2, 15, 64, 6
    x = jax.random.normal(kx, (batch, input_dim), jnp.float32)
    w1, b1, w2, b2 = init_qnet_params(kp, input_dim, hidden_dim, num_actions)

    ref = jnp.maximum(x @ w1.T + b1, 0.0) @ w2.T + b2

    # f32 path (exact vs reference).
    out = jax.block_until_ready(qnet_forward(x, w1, b1, w2, b2))
    assert out.shape == (batch, num_actions)
    assert jnp.allclose(out, ref, atol=1e-5, rtol=1e-5)

    # bf16 x stream (the bandwidth-saving config when states arrive as bf16).
    out_bf16 = jax.block_until_ready(
        qnet_forward(x.astype(jnp.bfloat16), w1, b1, w2, b2))
    assert out_bf16.shape == (batch, num_actions)
    assert jnp.allclose(out_bf16, ref, atol=1e-1, rtol=5e-2)

    print("KERNEL_OK")
</pallas_src>

<mosaic_0001>
module attributes {stable_mosaic.version = 11 : i64} {
  func.func @_qnet_kernel(%arg0: i32, %arg1: memref<128x15xf32, #tpu.memory_space<vmem>>, %arg2: memref<15x64xf32, #tpu.memory_space<vmem>>, %arg3: memref<1x64xf32, #tpu.memory_space<vmem>>, %arg4: memref<64x6xf32, #tpu.memory_space<vmem>>, %arg5: memref<1x6xf32, #tpu.memory_space<vmem>>, %arg6: memref<128x6xf32, #tpu.memory_space<vmem>>) attributes {dimension_semantics = [#tpu.dimension_semantics<parallel>], iteration_bounds = array<i64: 1>, scalar_prefetch = 0 : i64, scratch_operands = 0 : i64, tpu.core_type = #tpu.core_type<tc>, window_params = [{transform_indices = @transform_0, window_bounds = array<i64: 128, 15>}, {pipeline_mode = #tpu.pipeline_mode<synchronous>, transform_indices = @transform_1, window_bounds = array<i64: 15, 64>}, {pipeline_mode = #tpu.pipeline_mode<synchronous>, transform_indices = @transform_2, window_bounds = array<i64: 1, 64>}, {pipeline_mode = #tpu.pipeline_mode<synchronous>, transform_indices = @transform_3, window_bounds = array<i64: 64, 6>}, {pipeline_mode = #tpu.pipeline_mode<synchronous>, transform_indices = @transform_4, window_bounds = array<i64: 1, 6>}, {transform_indices = @transform_5, window_bounds = array<i64: 128, 6>}]} {
    %c0 = arith.constant 0 : index
    %c0_0 = arith.constant 0 : index
    %0 = vector.load %arg1[%c0, %c0_0] : memref<128x15xf32, #tpu.memory_space<vmem>>, vector<128x15xf32>
    %c0_1 = arith.constant 0 : index
    %c0_2 = arith.constant 0 : index
    %1 = vector.load %arg2[%c0_1, %c0_2] : memref<15x64xf32, #tpu.memory_space<vmem>>, vector<15x64xf32>
    %cst = arith.constant dense<0.000000e+00> : vector<128x64xf32>
    %2 = tpu.matmul %0, %1, %cst {dimension_numbers = #tpu.dot_dimension_numbers<[1], [0], [0], [1], [0, 0, 1, 1], [], []>} : vector<128x15xf32>, vector<15x64xf32>, vector<128x64xf32> -> vector<128x64xf32>
    %c0_3 = arith.constant 0 : index
    %c0_4 = arith.constant 0 : index
    %3 = vector.load %arg3[%c0_3, %c0_4] : memref<1x64xf32, #tpu.memory_space<vmem>>, vector<1x64xf32>
    %4 = vector.broadcast %3 : vector<1x64xf32> to vector<128x64xf32>
    %5 = arith.addf %2, %4 : vector<128x64xf32>
    %cst_5 = arith.constant 0.000000e+00 : f32
    %6 = vector.broadcast %cst_5 : f32 to vector<128x64xf32>
    %7 = arith.maximumf %5, %6 : vector<128x64xf32>
    %c0_6 = arith.constant 0 : index
    %c0_7 = arith.constant 0 : index
    %8 = vector.load %arg4[%c0_6, %c0_7] : memref<64x6xf32, #tpu.memory_space<vmem>>, vector<64x6xf32>
    %cst_8 = arith.constant dense<0.000000e+00> : vector<128x6xf32>
    %9 = tpu.matmul %7, %8, %cst_8 {dimension_numbers = #tpu.dot_dimension_numbers<[1], [0], [0], [1], [0, 0, 1, 1], [], []>} : vector<128x64xf32>, vector<64x6xf32>, vector<128x6xf32> -> vector<128x6xf32>
    %c0_9 = arith.constant 0 : index
    %c0_10 = arith.constant 0 : index
    %10 = vector.load %arg5[%c0_9, %c0_10] : memref<1x6xf32, #tpu.memory_space<vmem>>, vector<1x6xf32>
    %11 = vector.broadcast %10 : vector<1x6xf32> to vector<128x6xf32>
    %12 = arith.addf %9, %11 : vector<128x6xf32>
    %c0_11 = arith.constant 0 : index
    %c0_12 = arith.constant 0 : index
    %13 = vector.load %arg6[%c0_11, %c0_12] : memref<128x6xf32, #tpu.memory_space<vmem>>, vector<128x6xf32>
    tpu.vector_store %arg6[%c0_11, %c0_12], %12 {strides = array<i32>} : memref<128x6xf32, #tpu.memory_space<vmem>>, vector<128x6xf32>,
    return
  }
  func.func @transform_0(%arg0: i32) -> (i32, i32) {
    %c0_i32 = arith.constant 0 : i32
    %c0_i32_0 = arith.constant 0 : i32
    return %arg0, %c0_i32 : i32, i32
  }
  func.func @transform_1(%arg0: i32) -> (i32, i32) {
    %c0_i32 = arith.constant 0 : i32
    %c0_i32_0 = arith.constant 0 : i32
    %c0_i32_1 = arith.constant 0 : i32
    return %c0_i32, %c0_i32_0 : i32, i32
  }
  func.func @transform_2(%arg0: i32) -> (i32, i32) {
    %c0_i32 = arith.constant 0 : i32
    %c0_i32_0 = arith.constant 0 : i32
    %c0_i32_1 = arith.constant 0 : i32
    return %c0_i32, %c0_i32_0 : i32, i32
  }
  func.func @transform_3(%arg0: i32) -> (i32, i32) {
    %c0_i32 = arith.constant 0 : i32
    %c0_i32_0 = arith.constant 0 : i32
    %c0_i32_1 = arith.constant 0 : i32
    return %c0_i32, %c0_i32_0 : i32, i32
  }
  func.func @transform_4(%arg0: i32) -> (i32, i32) {
    %c0_i32 = arith.constant 0 : i32
    %c0_i32_0 = arith.constant 0 : i32
    %c0_i32_1 = arith.constant 0 : i32
    return %c0_i32, %c0_i32_0 : i32, i32
  }
  func.func @transform_5(%arg0: i32) -> (i32, i32) {
    %c0_i32 = arith.constant 0 : i32
    %c0_i32_0 = arith.constant 0 : i32
    return %arg0, %c0_i32 : i32, i32
  }
}

</mosaic_0001>

<llo_original>
// kernel: tpu_custom_call.1
$region0: #{tpu_custom_call.1}
  #allocation0 [shape = 'u32[]', space=smem, size = 0x4, offset = 0x4, fixed_abs, tag = 'smem constant byte address 0x4 - core index']
  #allocation1 [shape = 'u32[72,128]{1,0:T(1,128)}', space=vmem, size = 0x9000, scoped, tag = 'internal scratch']
  %s0 = inlined_call_operand.vmem [shape: f32[128,15], index: 0, kind: input, shape index: {}]
  %s1 = inlined_call_operand.vmem [shape: f32[15,64], index: 1, kind: input, shape index: {}]
  %s2 = inlined_call_operand.vmem [shape: f32[1,64], index: 2, kind: input, shape index: {}]
  %s3 = inlined_call_operand.vmem [shape: f32[64,6], index: 3, kind: input, shape index: {}]
  %s4 = inlined_call_operand.vmem [shape: f32[1,6], index: 4, kind: input, shape index: {}]
  %s5 = inlined_call_operand.vmem [shape: f32[128,6], index: 5, kind: output, shape index: {}]
  %s6 = sld [smem:[#allocation0]]
  $region30: #{tpu_custom_call.1} parent=0
    _
  %s8 = ssub.s32 1, %s6
  %s9 = scalar_select 0, %s8, %s6
  // Predicated region
  $region2: #{tpu_custom_call.1} parent=0 // pred_check
    _
  $region3: #{tpu_custom_call.1} parent=0 // pred_check_branch
    %11 = sbr.rel (0) target = $region5
  $region4: #{tpu_custom_call.1} parent=0 // pred_region
    _
  $region5: #{tpu_custom_call.1} parent=0 // pred_fallthru
    _
  // Predicated region
  $region6: #{tpu_custom_call.1} parent=0 // pred_check
    _
  $region7: #{tpu_custom_call.1} parent=0 // pred_check_branch
    %13 = sbr.rel (0) target = $region9
  $region8: #{tpu_custom_call.1} parent=0 // pred_region
    _
  $region9: #{tpu_custom_call.1} parent=0 // pred_fallthru
    _
  // Predicated region
  $region10: #{tpu_custom_call.1} parent=0 // pred_check
    _
  $region11: #{tpu_custom_call.1} parent=0 // pred_check_branch
    %15 = sbr.rel (0) target = $region13
  $region12: #{tpu_custom_call.1} parent=0 // pred_region
    _
  $region13: #{tpu_custom_call.1} parent=0 // pred_fallthru
    _
  // Predicated region
  $region14: #{tpu_custom_call.1} parent=0 // pred_check
    _
  $region15: #{tpu_custom_call.1} parent=0 // pred_check_branch
    %17 = sbr.rel (0) target = $region17
  $region16: #{tpu_custom_call.1} parent=0 // pred_region
    _
  $region17: #{tpu_custom_call.1} parent=0 // pred_fallthru
    _
  // Predicated region
  $region18: #{tpu_custom_call.1} parent=0 // pred_check
    _
  $region19: #{tpu_custom_call.1} parent=0 // pred_check_branch
    %19 = sbr.rel (0) target = $region21
  $region20: #{tpu_custom_call.1} parent=0 // pred_region
    _
  $region21: #{tpu_custom_call.1} parent=0 // pred_fallthru
    _
  %v20 = vld [vmem:[%s0] sm:$0xff]
  %v21 = vld [vmem:[%s0 + $0x8] sm:$0xff]
  %v22 = vld [vmem:[%s0 + $0x10] sm:$0xff]
  %v23 = vld [vmem:[%s0 + $0x18] sm:$0xff]
  %v24 = vld [vmem:[%s0 + $0x20] sm:$0xff]
  %v25 = vld [vmem:[%s0 + $0x28] sm:$0xff]
  %v26 = vld [vmem:[%s0 + $0x30] sm:$0xff]
  %v27 = vld [vmem:[%s0 + $0x38] sm:$0xff]
  %v28 = vld [vmem:[%s0 + $0x40] sm:$0xff]
  %v29 = vld [vmem:[%s0 + $0x48] sm:$0xff]
  %v30 = vld [vmem:[%s0 + $0x50] sm:$0xff]
  %v31 = vld [vmem:[%s0 + $0x58] sm:$0xff]
  %v32 = vld [vmem:[%s0 + $0x60] sm:$0xff]
  %v33 = vld [vmem:[%s0 + $0x68] sm:$0xff]
  %v34 = vld [vmem:[%s0 + $0x70] sm:$0xff]
  %v35 = vld [vmem:[%s0 + $0x78] sm:$0xff]
  %v36 = vld [vmem:[%s1] sm:$0xff]
  %v37 = vld [vmem:[%s1 + $0x8] sm:$0x7f]
  %v38 = vld [vmem:[%s2] sm:$0x1]
  %v40 = vperm.slane %v38, 0
  %vm42 = vcmask 121856
  %v44 = vsel %vm42, %v20, 0
  %v47 = vsel %vm42, %v21, 0
  %v50 = vsel %vm42, %v22, 0
  %v53 = vsel %vm42, %v23, 0
  %v56 = vsel %vm42, %v24, 0
  %v59 = vsel %vm42, %v25, 0
  %v62 = vsel %vm42, %v26, 0
  %v65 = vsel %vm42, %v27, 0
  %v68 = vsel %vm42, %v28, 0
  %v71 = vsel %vm42, %v29, 0
  %v74 = vsel %vm42, %v30, 0
  %v77 = vsel %vm42, %v31, 0
  %v80 = vsel %vm42, %v32, 0
  %v83 = vsel %vm42, %v33, 0
  %v86 = vsel %vm42, %v34, 0
  %v89 = vsel %vm42, %v35, 0
  %vm91 = vcmask 1046528
  %v93 = vsel %vm91, %v37, 0
  %95 = vmatpush.msra.mxu0 0.0
  %96 = vmatpush.msra.mxu0 0.0
  %97 = vmatpush.msra.mxu0 0.0
  %98 = vmatpush.msra.mxu0 0.0
  %99 = vmatpush.msra.mxu0 0.0
  %100 = vmatpush.msra.mxu0 0.0
  %101 = vmatpush.msra.mxu0 0.0
  %102 = vmatpush.msra.mxu0 0.0
  %103 = vmatpush.msra.mxu0 0.0
  %104 = vmatpush.msra.mxu0 0.0
  %105 = vmatpush.msra.mxu0 0.0
  %106 = vmatpush.msra.mxu0 0.0
  %107 = vmatpush.msra.mxu0 0.0
  %108 = vmatpush.msra.mxu0 0.0
  %109 = vmatpush.msra.mxu0 %v93
  %110 = vmatpush.msra.mxu0 %v36
  %111 = vmatmul.f32.gmra.mxu0 %v44
  %v112 = vpop.f32.mrf.mxu0
  %v113 = vadd.f32 %v40, %v112
  %114 = vmatmul.f32.gmra.mxu0 %v47
  %v115 = vpop.f32.mrf.mxu0
  %v116 = vadd.f32 %v40, %v115
  %117 = vmatmul.f32.gmra.mxu0 %v50
  %v118 = vpop.f32.mrf.mxu0
  %v119 = vadd.f32 %v40, %v118
  %120 = vmatmul.f32.gmra.mxu0 %v53
  %v121 = vpop.f32.mrf.mxu0
  %v122 = vadd.f32 %v40, %v121
  %123 = vmatmul.f32.gmra.mxu0 %v56
  %v124 = vpop.f32.mrf.mxu0
  %v125 = vadd.f32 %v40, %v124
  %126 = vmatmul.f32.gmra.mxu0 %v59
  %v127 = vpop.f32.mrf.mxu0
  %v128 = vadd.f32 %v40, %v127
  %129 = vmatmul.f32.gmra.mxu0 %v62
  %v130 = vpop.f32.mrf.mxu0
  %v131 = vadd.f32 %v40, %v130
  %132 = vmatmul.f32.gmra.mxu0 %v65
  %v133 = vpop.f32.mrf.mxu0
  %v134 = vadd.f32 %v40, %v133
  %135 = vmatmul.f32.gmra.mxu0 %v68
  %v136 = vpop.f32.mrf.mxu0
  %v137 = vadd.f32 %v40, %v136
  %138 = vmatmul.f32.gmra.mxu0 %v71
  %v139 = vpop.f32.mrf.mxu0
  %v140 = vadd.f32 %v40, %v139
  %141 = vmatmul.f32.gmra.mxu0 %v74
  %v142 = vpop.f32.mrf.mxu0
  %v143 = vadd.f32 %v40, %v142
  %144 = vmatmul.f32.gmra.mxu0 %v77
  %v145 = vpop.f32.mrf.mxu0
  %v146 = vadd.f32 %v40, %v145
  %147 = vmatmul.f32.gmra.mxu0 %v80
  %v148 = vpop.f32.mrf.mxu0
  %v149 = vadd.f32 %v40, %v148
  %150 = vmatmul.f32.gmra.mxu0 %v83
  %v151 = vpop.f32.mrf.mxu0
  %v152 = vadd.f32 %v40, %v151
  %153 = vmatmul.f32.gmra.mxu0 %v86
  %v154 = vpop.f32.mrf.mxu0
  %v155 = vadd.f32 %v40, %v154
  %156 = vmatmul.f32.gmra.mxu0 %v89
  %v157 = vpop.f32.mrf.mxu0
  %v158 = vadd.f32 %v40, %v157
  %159 = vdwg.mxu0
  %v160 = vmax.f32 %v113, 0.0
  %v161 = vmax.f32 %v116, 0.0
  %v162 = vmax.f32 %v119, 0.0
  %v163 = vmax.f32 %v122, 0.0
  %v164 = vmax.f32 %v125, 0.0
  %v165 = vmax.f32 %v128, 0.0
  %v166 = vmax.f32 %v131, 0.0
  %v167 = vmax.f32 %v134, 0.0
  %v168 = vmax.f32 %v137, 0.0
  %v169 = vmax.f32 %v140, 0.0
  %v170 = vmax.f32 %v143, 0.0
  %v171 = vmax.f32 %v146, 0.0
  %v172 = vmax.f32 %v149, 0.0
  %v173 = vmax.f32 %v152, 0.0
  %v174 = vmax.f32 %v155, 0.0
  %v175 = vmax.f32 %v158, 0.0
  %v176 = vld [vmem:[%s3] sm:$0xff]
  %v177 = vld [vmem:[%s3 + $0x8] sm:$0xff]
  %v178 = vld [vmem:[%s3 + $0x10] sm:$0xff]
  %v179 = vld [vmem:[%s3 + $0x18] sm:$0xff]
  %v180 = vld [vmem:[%s3 + $0x20] sm:$0xff]
  %v181 = vld [vmem:[%s3 + $0x28] sm:$0xff]
  %v182 = vld [vmem:[%s3 + $0x30] sm:$0xff]
  %v183 = vld [vmem:[%s3 + $0x38] sm:$0xff]
  %v184 = vld [vmem:[%s4] sm:$0x1]
  %v186 = vperm.slane %v184, 0
  %vm188 = vcmask 523264
  %v190 = vsel %vm188, %v160, 0
  %v193 = vsel %vm188, %v161, 0
  %v196 = vsel %vm188, %v162, 0
  %v199 = vsel %vm188, %v163, 0
  %v202 = vsel %vm188, %v164, 0
  %v205 = vsel %vm188, %v165, 0
  %v208 = vsel %vm188, %v166, 0
  %v211 = vsel %vm188, %v167, 0
  %v214 = vsel %vm188, %v168, 0
  %v217 = vsel %vm188, %v169, 0
  %v220 = vsel %vm188, %v170, 0
  %v223 = vsel %vm188, %v171, 0
  %v226 = vsel %vm188, %v172, 0
  %v229 = vsel %vm188, %v173, 0
  %v232 = vsel %vm188, %v174, 0
  %v235 = vsel %vm188, %v175, 0
  %237 = vmatpush.msra.mxu0 0.0
  %238 = vmatpush.msra.mxu0 0.0
  %239 = vmatpush.msra.mxu0 0.0
  %240 = vmatpush.msra.mxu0 0.0
  %241 = vmatpush.msra.mxu0 0.0
  %242 = vmatpush.msra.mxu0 0.0
  %243 = vmatpush.msra.mxu0 0.0
  %244 = vmatpush.msra.mxu0 0.0
  %245 = vmatpush.msra.mxu0 %v183
  %246 = vmatpush.msra.mxu0 %v182
  %247 = vmatpush.msra.mxu0 %v181
  %248 = vmatpush.msra.mxu0 %v180
  %249 = vmatpush.msra.mxu0 %v179
  %250 = vmatpush.msra.mxu0 %v178
  %251 = vmatpush.msra.mxu0 %v177
  %252 = vmatpush.msra.mxu0 %v176
  %253 = vmatmul.f32.gmra.mxu0 %v190
  %v254 = vpop.f32.mrf.mxu0
  %v255 = vadd.f32 %v186, %v254
  %256 = vmatmul.f32.gmra.mxu0 %v193
  %v257 = vpop.f32.mrf.mxu0
  %v258 = vadd.f32 %v186, %v257
  %259 = vmatmul.f32.gmra.mxu0 %v196
  %v260 = vpop.f32.mrf.mxu0
  %v261 = vadd.f32 %v186, %v260
  %262 = vmatmul.f32.gmra.mxu0 %v199
  %v263 = vpop.f32.mrf.mxu0
  %v264 = vadd.f32 %v186, %v263
  %265 = vmatmul.f32.gmra.mxu0 %v202
  %v266 = vpop.f32.mrf.mxu0
  %v267 = vadd.f32 %v186, %v266
  %268 = vmatmul.f32.gmra.mxu0 %v205
  %v269 = vpop.f32.mrf.mxu0
  %v270 = vadd.f32 %v186, %v269
  %271 = vmatmul.f32.gmra.mxu0 %v208
  %v272 = vpop.f32.mrf.mxu0
  %v273 = vadd.f32 %v186, %v272
  %274 = vmatmul.f32.gmra.mxu0 %v211
  %v275 = vpop.f32.mrf.mxu0
  %v276 = vadd.f32 %v186, %v275
  %277 = vmatmul.f32.gmra.mxu0 %v214
  %v278 = vpop.f32.mrf.mxu0
  %v279 = vadd.f32 %v186, %v278
  %280 = vmatmul.f32.gmra.mxu0 %v217
  %v281 = vpop.f32.mrf.mxu0
  %v282 = vadd.f32 %v186, %v281
  %283 = vmatmul.f32.gmra.mxu0 %v220
  %v284 = vpop.f32.mrf.mxu0
  %v285 = vadd.f32 %v186, %v284
  %286 = vmatmul.f32.gmra.mxu0 %v223
  %v287 = vpop.f32.mrf.mxu0
  %v288 = vadd.f32 %v186, %v287
  %289 = vmatmul.f32.gmra.mxu0 %v226
  %v290 = vpop.f32.mrf.mxu0
  %v291 = vadd.f32 %v186, %v290
  %292 = vmatmul.f32.gmra.mxu0 %v229
  %v293 = vpop.f32.mrf.mxu0
  %v294 = vadd.f32 %v186, %v293
  %295 = vmatmul.f32.gmra.mxu0 %v232
  %v296 = vpop.f32.mrf.mxu0
  %v297 = vadd.f32 %v186, %v296
  %298 = vmatmul.f32.gmra.mxu0 %v235
  %v299 = vpop.f32.mrf.mxu0
  %v300 = vadd.f32 %v186, %v299
  %301 = vdwg.mxu0
  %vm302 = vcmask 48128
  %303 = vst.msk [vmem:[%s5] sm:$0xff] %vm302, %v255
  %304 = vst.msk [vmem:[%s5 + $0x8] sm:$0xff] %vm302, %v258
  %305 = vst.msk [vmem:[%s5 + $0x10] sm:$0xff] %vm302, %v261
  %306 = vst.msk [vmem:[%s5 + $0x18] sm:$0xff] %vm302, %v264
  %307 = vst.msk [vmem:[%s5 + $0x20] sm:$0xff] %vm302, %v267
  %308 = vst.msk [vmem:[%s5 + $0x28] sm:$0xff] %vm302, %v270
  %309 = vst.msk [vmem:[%s5 + $0x30] sm:$0xff] %vm302, %v273
  %310 = vst.msk [vmem:[%s5 + $0x38] sm:$0xff] %vm302, %v276
  %311 = vst.msk [vmem:[%s5 + $0x40] sm:$0xff] %vm302, %v279
  %312 = vst.msk [vmem:[%s5 + $0x48] sm:$0xff] %vm302, %v282
  %313 = vst.msk [vmem:[%s5 + $0x50] sm:$0xff] %vm302, %v285
  %314 = vst.msk [vmem:[%s5 + $0x58] sm:$0xff] %vm302, %v288
  %315 = vst.msk [vmem:[%s5 + $0x60] sm:$0xff] %vm302, %v291
  %316 = vst.msk [vmem:[%s5 + $0x68] sm:$0xff] %vm302, %v294
  %317 = vst.msk [vmem:[%s5 + $0x70] sm:$0xff] %vm302, %v297
  %318 = vst.msk [vmem:[%s5 + $0x78] sm:$0xff] %vm302, %v300
  // Predicated region
  $region22: #{tpu_custom_call.1} parent=0 // pred_check
    _
  $region23: #{tpu_custom_call.1} parent=0 // pred_check_branch
    %320 = sbr.rel (0) target = $region25
  $region24: #{tpu_custom_call.1} parent=0 // pred_region
    _
  $region25: #{tpu_custom_call.1} parent=0 // pred_fallthru
    _
  // Predicated region
  $region26: #{tpu_custom_call.1} parent=0 // pred_check
    _
  $region27: #{tpu_custom_call.1} parent=0 // pred_check_branch
    %322 = sbr.rel (0) target = $region29
  $region28: #{tpu_custom_call.1} parent=0 // pred_region
    _
  $region29: #{tpu_custom_call.1} parent=0 // pred_fallthru
    _

</llo_original>
